<compile_context>
chip_gen: v7x
topology: tpu7x:2x2x1
jax: 0.10.0
libtpu: 0.0.40
codegen_flags: <defaults>
</compile_context>

<pallas_src>
import functools

import jax
import jax.numpy as jnp
from jax import lax
from jax.experimental import pallas as pl
from jax.experimental.pallas import tpu as pltpu

_F32 = jnp.float32
_VMEM_LIMIT = 32 * 1024 * 1024        # explicit scoped-VMEM budget (safe on v5e/v6e/v7x)
_FUSED_MAX_BYTES = 4 * 1024 * 1024    # fused single-pass path when the f32 slab is this small
_TILE_BYTES_CAP = 4 * 1024 * 1024     # per-block byte budget for the two-pass row tiles


def _round_up(x, m):
    return ((x + m - 1) // m) * m


def _fold_factor(n_rows, feat):
    """Lane-fold factor k: reshape (rows, F) -> (rows/k, k*F) to densify lanes."""
    if feat >= 128 or 128 % feat != 0:
        return 1
    k = 128 // feat
    while k > 1 and n_rows % k != 0:
        k //= 2
    return k


# ----------------------------- Pallas kernels ------------------------------ #

def _fused_kernel(x_ref, gamma_ref, beta_ref, o_ref, *, count, eps, k, feat):
    """Single pass: stats + normalize on a lane-folded slab resident in VMEM."""
    x = x_ref[...].astype(_F32)                        # (rows_f, k*feat)
    col_sum = jnp.sum(x, axis=0, keepdims=True)        # (1, k*feat), per-lane
    col_sq = jnp.sum(x * x, axis=0, keepdims=True)

    # Combine the k folded groups: lane j holds feature j % feat, so summing the
    # k cyclic lane-rolls by multiples of `feat` puts the per-feature total on
    # every lane of its group.  Rolls go to the XLU slot (essentially free).
    tot_sum, tot_sq = col_sum, col_sq
    for g in range(1, k):
        tot_sum = tot_sum + pltpu.roll(col_sum, shift=g * feat, axis=1)
        tot_sq = tot_sq + pltpu.roll(col_sq, shift=g * feat, axis=1)

    inv_n = 1.0 / count
    mean = tot_sum * inv_n
    var = jnp.maximum(tot_sq * inv_n - mean * mean, 0.0)   # clamp cancellation
    scale = gamma_ref[...] * lax.rsqrt(var + eps)           # gamma already (1, width)
    shift = beta_ref[...] - mean * scale
    o_ref[...] = (x * scale + shift).astype(o_ref.dtype)


def _stats_kernel(x_ref, sum_ref, sumsq_ref, *,
                  rows_f, tile_r, tiles_per_split, ragged):
    """Accumulate per-lane sum / sum-of-squares over row tiles (ragged tile masked)."""
    i = pl.program_id(1)   # row tiles within the split ("arbitrary")

    @pl.when(i == 0)
    def _():
        sum_ref[...] = jnp.zeros_like(sum_ref)
        sumsq_ref[...] = jnp.zeros_like(sumsq_ref)

    x = x_ref[...].astype(_F32)
    if ragged:
        c = pl.program_id(0)   # megacore split ("parallel")
        row0 = (c * tiles_per_split + i) * tile_r
        rid = row0 + lax.broadcasted_iota(jnp.int32, x_ref.shape, 0)
        x = jnp.where(rid < rows_f, x, 0.0)            # mask BEFORE squaring

    sum_ref[...] += jnp.sum(x, axis=0, keepdims=True)[None]     # (1, 1, width)
    sumsq_ref[...] += jnp.sum(x * x, axis=0, keepdims=True)[None]


def _normalize_kernel(x_ref, scale_ref, shift_ref, o_ref):
    """y = x * scale + shift (scale/shift precomputed per lane)."""
    x = x_ref[...].astype(_F32)
    o_ref[...] = (x * scale_ref[...] + shift_ref[...]).astype(o_ref.dtype)


# ------------------------------ Python wrapper ------------------------------ #

def slate_batch_norm_1d(x, gamma, beta, *, eps=1e-5, tile_r=2048,
                        max_fused_bytes=_FUSED_MAX_BYTES):
    """Pallas implementation of SlateBatchNorm1d forward (training-mode batch stats).

    2D (B, F) or 3D (B, N, F) inputs; per-feature normalization over all other dims.
    """
    assert x.ndim in (2, 3), f"Invalid input shape {x.ndim}"
    orig_shape = x.shape
    feat = orig_shape[-1]

    # (B, N, F) -> (B*N, F): identical stats to transpose + BatchNorm1d over F.
    rows2d = x.reshape(-1, feat)
    n_rows = rows2d.shape[0]
    count = float(n_rows)
    eps = float(eps)

    # Lane-fold to a (rows/k, k*F) slab (free row-major reshape).
    k = _fold_factor(n_rows, feat)
    rows_f = n_rows // k
    width = k * feat
    xf = rows2d.reshape(rows_f, width)

    gamma_f = gamma.reshape(1, feat).astype(_F32)
    beta_f = beta.reshape(1, feat).astype(_F32)

    # ---------------- Fused single-read path (slab fits in VMEM) -------------
    fused_ok = rows_f * width * 4 <= max_fused_bytes
    if fused_ok and k > 1 and width != 128:
        # Keep the in-kernel roll-combine restricted to native 128-lane widths;
        # a small slab is cheap either way, so drop the fold instead.
        k, rows_f, width, xf = 1, n_rows, feat, rows2d

    if fused_ok:
        gamma_w = jnp.tile(gamma_f, (1, k))              # (1, width)
        beta_w = jnp.tile(beta_f, (1, k))
        fused = functools.partial(_fused_kernel, count=count, eps=eps,
                                  k=k, feat=feat)
        yf = pl.pallas_call(
            fused,
            out_shape=jax.ShapeDtypeStruct((rows_f, width), x.dtype),
            grid_spec=pltpu.PrefetchScalarGridSpec(
                num_scalar_prefetch=0,
                grid=(1,),
                in_specs=[pl.BlockSpec((rows_f, width), lambda i: (0, 0)),
                          pl.BlockSpec((1, width), lambda i: (0, 0)),
                          pl.BlockSpec((1, width), lambda i: (0, 0))],
                out_specs=pl.BlockSpec((rows_f, width), lambda i: (0, 0)),
            ),
            compiler_params=pltpu.CompilerParams(
                dimension_semantics=("arbitrary",),
                vmem_limit_bytes=_VMEM_LIMIT),
        )(xf, gamma_w, beta_w)
        return yf.reshape(orig_shape)

    # ---------------- Two-pass path for large slabs --------------------------
    # Row tile: big (amortize ~0.35us/step overhead), multiple of 8, VMEM
    # budgeted, never larger than the array (ragged last tile is masked).
    if rows_f >= 8:
        tr = min(_round_up(max(int(tile_r), 8), 8), (rows_f // 8) * 8)
        max_rows_by_vmem = max(8, ((_TILE_BYTES_CAP // (width * 4)) // 8) * 8)
        tr = min(tr, max_rows_by_vmem)
    else:
        tr = rows_f
    n_tiles = pl.cdiv(rows_f, tr)
    ragged = (rows_f % tr) != 0
    # Split the stats reduction over 2 TensorCores (v7x megacore) when it
    # divides evenly; per-core partials are combined in the tiny wrapper step.
    num_splits = 2 if (n_tiles >= 2 and n_tiles % 2 == 0) else 1
    tiles_per_split = n_tiles // num_splits

    stats = functools.partial(_stats_kernel, rows_f=rows_f, tile_r=tr,
                              tiles_per_split=tiles_per_split, ragged=ragged)
    sums, sumsqs = pl.pallas_call(
        stats,
        out_shape=(jax.ShapeDtypeStruct((num_splits, 1, width), _F32),
                   jax.ShapeDtypeStruct((num_splits, 1, width), _F32)),
        grid_spec=pltpu.PrefetchScalarGridSpec(
            num_scalar_prefetch=0,
            grid=(num_splits, tiles_per_split),
            in_specs=[pl.BlockSpec(
                (tr, width),
                lambda c, i: (c * tiles_per_split + i, 0))],
            out_specs=[pl.BlockSpec((1, 1, width), lambda c, i: (c, 0, 0)),
                       pl.BlockSpec((1, 1, width), lambda c, i: (c, 0, 0))],
        ),
        compiler_params=pltpu.CompilerParams(
            dimension_semantics=("parallel", "arbitrary"),
            vmem_limit_bytes=_VMEM_LIMIT),
    )(xf)

    # Tiny (F,)-sized wrapper combine (fuses into one small XLA op): fold the k
    # lane groups and the core splits, then precompute per-lane scale/shift.
    col_sum = jnp.sum(sums, axis=(0, 1))                 # (width,)
    col_sq = jnp.sum(sumsqs, axis=(0, 1))
    feat_sum = col_sum.reshape(k, feat).sum(axis=0)      # (feat,)
    feat_sq = col_sq.reshape(k, feat).sum(axis=0)
    mean = feat_sum / count
    var = jnp.maximum(feat_sq / count - mean * mean, 0.0)
    scale = gamma.reshape(feat).astype(_F32) * lax.rsqrt(var + eps)
    shift = beta.reshape(feat).astype(_F32) - mean * scale
    scale_w = jnp.tile(scale, (k,)).reshape(1, width)
    shift_w = jnp.tile(shift, (k,)).reshape(1, width)

    yf = pl.pallas_call(
        _normalize_kernel,
        out_shape=jax.ShapeDtypeStruct((rows_f, width), x.dtype),
        grid_spec=pltpu.PrefetchScalarGridSpec(
            num_scalar_prefetch=0,
            grid=(n_tiles,),
            in_specs=[pl.BlockSpec((tr, width), lambda i: (i, 0)),
                      pl.BlockSpec((1, width), lambda i: (0, 0)),
                      pl.BlockSpec((1, width), lambda i: (0, 0))],
            out_specs=pl.BlockSpec((tr, width), lambda i: (i, 0)),
        ),
        compiler_params=pltpu.CompilerParams(
            dimension_semantics=("parallel",),
            vmem_limit_bytes=_VMEM_LIMIT),
    )(xf, scale_w, shift_w)
    return yf.reshape(orig_shape)


# -------------------------------- Reference --------------------------------- #

def _reference(x, gamma, beta, eps=1e-5):
    feat = x.shape[-1]
    rows = x.reshape(-1, feat).astype(jnp.float32)
    mean = rows.mean(axis=0, keepdims=True)
    var = rows.var(axis=0, keepdims=True)  # biased, as in BatchNorm training
    y = (rows - mean) * lax.rsqrt(var + eps) * gamma.reshape(1, feat) \
        + beta.reshape(1, feat)
    return y.reshape(x.shape).astype(x.dtype)


# ---------------------------------- Main ------------------------------------ #

if __name__ == "__main__":
    key = jax.random.PRNGKey(0)
    k1, k2, k3, k4, k5, k6 = jax.random.split(key, 6)

    F = 32  # num_features (BatchNorm1d num_features)
    gamma = 1.0 + 0.1 * jax.random.normal(k3, (F,), dtype=jnp.float32)
    beta = 0.1 * jax.random.normal(k4, (F,), dtype=jnp.float32)

    # 3D case (batch, num_candidates, item_feats) -> fused single-pass path.
    x3 = jax.random.normal(k1, (2, 8, F), dtype=jnp.float32)
    y3 = slate_batch_norm_1d(x3, gamma, beta)
    jax.block_until_ready(y3)
    assert y3.shape == x3.shape
    assert jnp.max(jnp.abs(y3 - _reference(x3, gamma, beta))) < 1e-4

    # 2D case (batch, feat_dim) -> fused path.
    x2 = jax.random.normal(k2, (4, F), dtype=jnp.float32)
    y2 = slate_batch_norm_1d(x2, gamma, beta)
    jax.block_until_ready(y2)
    assert y2.shape == x2.shape
    assert jnp.max(jnp.abs(y2 - _reference(x2, gamma, beta))) < 1e-4

    # Two-pass path exercising the 2-way (megacore) stats split.
    x4 = jax.random.normal(k5, (4, 16, F), dtype=jnp.float32)
    y4 = slate_batch_norm_1d(x4, gamma, beta, tile_r=8, max_fused_bytes=0)
    jax.block_until_ready(y4)
    assert jnp.max(jnp.abs(y4 - _reference(x4, gamma, beta))) < 1e-4

    # Two-pass path with a ragged (masked) last row tile and partial lane fold.
    x5 = jax.random.normal(k6, (3, 14, F), dtype=jnp.float32)
    y5 = slate_batch_norm_1d(x5, gamma, beta, tile_r=16, max_fused_bytes=0)
    jax.block_until_ready(y5)
    assert jnp.max(jnp.abs(y5 - _reference(x5, gamma, beta))) < 1e-4

    print("KERNEL_OK")
</pallas_src>

<mosaic_0001>
module attributes {stable_mosaic.version = 11 : i64} {
  func.func @_fused_kernel(%arg0: i32, %arg1: memref<4x128xf32, #tpu.memory_space<vmem>>, %arg2: memref<1x128xf32, #tpu.memory_space<vmem>>, %arg3: memref<1x128xf32, #tpu.memory_space<vmem>>, %arg4: memref<4x128xf32, #tpu.memory_space<vmem>>) attributes {dimension_semantics = [#tpu.dimension_semantics<arbitrary>], iteration_bounds = array<i64: 1>, scalar_prefetch = 0 : i64, scratch_operands = 0 : i64, tpu.core_type = #tpu.core_type<tc>, window_params = [{pipeline_mode = #tpu.pipeline_mode<synchronous>, transform_indices = @transform_0, window_bounds = array<i64: 4, 128>}, {pipeline_mode = #tpu.pipeline_mode<synchronous>, transform_indices = @transform_1, window_bounds = array<i64: 1, 128>}, {pipeline_mode = #tpu.pipeline_mode<synchronous>, transform_indices = @transform_2, window_bounds = array<i64: 1, 128>}, {pipeline_mode = #tpu.pipeline_mode<synchronous>, transform_indices = @transform_3, window_bounds = array<i64: 4, 128>}]} {
    %c0 = arith.constant 0 : index
    %c0_0 = arith.constant 0 : index
    %0 = vector.load %arg1[%c0, %c0_0] : memref<4x128xf32, #tpu.memory_space<vmem>>, vector<4x128xf32>
    %cst = arith.constant dense<0.000000e+00> : vector<128xf32>
    %1 = vector.multi_reduction <add>, %0, %cst [0] : vector<4x128xf32> to vector<128xf32>
    %2 = vector.shape_cast %1 : vector<128xf32> to vector<1x128xf32>
    %3 = arith.mulf %0, %0 : vector<4x128xf32>
    %cst_1 = arith.constant dense<0.000000e+00> : vector<128xf32>
    %4 = vector.multi_reduction <add>, %3, %cst_1 [0] : vector<4x128xf32> to vector<128xf32>
    %5 = vector.shape_cast %4 : vector<128xf32> to vector<1x128xf32>
    %c32_i32 = arith.constant 32 : i32
    %6 = tpu.dynamic_rotate %2 by %c32_i32 dim 1 : vector<1x128xf32>, i32 -> vector<1x128xf32>
    %7 = arith.addf %2, %6 : vector<1x128xf32>
    %c32_i32_2 = arith.constant 32 : i32
    %8 = tpu.dynamic_rotate %5 by %c32_i32_2 dim 1 : vector<1x128xf32>, i32 -> vector<1x128xf32>
    %9 = arith.addf %5, %8 : vector<1x128xf32>
    %c64_i32 = arith.constant 64 : i32
    %10 = tpu.dynamic_rotate %2 by %c64_i32 dim 1 : vector<1x128xf32>, i32 -> vector<1x128xf32>
    %11 = arith.addf %7, %10 : vector<1x128xf32>
    %c64_i32_3 = arith.constant 64 : i32
    %12 = tpu.dynamic_rotate %5 by %c64_i32_3 dim 1 : vector<1x128xf32>, i32 -> vector<1x128xf32>
    %13 = arith.addf %9, %12 : vector<1x128xf32>
    %c96_i32 = arith.constant 96 : i32
    %14 = tpu.dynamic_rotate %2 by %c96_i32 dim 1 : vector<1x128xf32>, i32 -> vector<1x128xf32>
    %15 = arith.addf %11, %14 : vector<1x128xf32>
    %c96_i32_4 = arith.constant 96 : i32
    %16 = tpu.dynamic_rotate %5 by %c96_i32_4 dim 1 : vector<1x128xf32>, i32 -> vector<1x128xf32>
    %17 = arith.addf %13, %16 : vector<1x128xf32>
    %cst_5 = arith.constant 6.250000e-02 : f32
    %18 = vector.broadcast %cst_5 : f32 to vector<1x128xf32>
    %19 = arith.mulf %15, %18 : vector<1x128xf32>
    %cst_6 = arith.constant 6.250000e-02 : f32
    %20 = vector.broadcast %cst_6 : f32 to vector<1x128xf32>
    %21 = arith.mulf %17, %20 : vector<1x128xf32>
    %22 = arith.mulf %19, %19 : vector<1x128xf32>
    %23 = arith.subf %21, %22 : vector<1x128xf32>
    %cst_7 = arith.constant 0.000000e+00 : f32
    %24 = vector.broadcast %cst_7 : f32 to vector<1x128xf32>
    %25 = arith.maximumf %23, %24 : vector<1x128xf32>
    %c0_8 = arith.constant 0 : index
    %c0_9 = arith.constant 0 : index
    %26 = vector.load %arg2[%c0_8, %c0_9] : memref<1x128xf32, #tpu.memory_space<vmem>>, vector<1x128xf32>
    %cst_10 = arith.constant 9.99999974E-6 : f32
    %27 = vector.broadcast %cst_10 : f32 to vector<1x128xf32>
    %28 = arith.addf %25, %27 : vector<1x128xf32>
    %29 = math.rsqrt %28 : vector<1x128xf32>
    %30 = arith.mulf %26, %29 : vector<1x128xf32>
    %c0_11 = arith.constant 0 : index
    %c0_12 = arith.constant 0 : index
    %31 = vector.load %arg3[%c0_11, %c0_12] : memref<1x128xf32, #tpu.memory_space<vmem>>, vector<1x128xf32>
    %32 = arith.mulf %19, %30 : vector<1x128xf32>
    %33 = arith.subf %31, %32 : vector<1x128xf32>
    %34 = vector.broadcast %30 : vector<1x128xf32> to vector<4x128xf32>
    %35 = arith.mulf %0, %34 : vector<4x128xf32>
    %36 = vector.broadcast %33 : vector<1x128xf32> to vector<4x128xf32>
    %37 = arith.addf %35, %36 : vector<4x128xf32>
    %c0_13 = arith.constant 0 : index
    %c0_14 = arith.constant 0 : index
    %38 = vector.load %arg4[%c0_13, %c0_14] : memref<4x128xf32, #tpu.memory_space<vmem>>, vector<4x128xf32>
    tpu.vector_store %arg4[%c0_13, %c0_14], %37 {strides = array<i32>} : memref<4x128xf32, #tpu.memory_space<vmem>>, vector<4x128xf32>,
    return
  }
  func.func @transform_0(%arg0: i32) -> (i32, i32) {
    %c0_i32 = arith.constant 0 : i32
    %c0_i32_0 = arith.constant 0 : i32
    %c0_i32_1 = arith.constant 0 : i32
    return %c0_i32, %c0_i32_0 : i32, i32
  }
  func.func @transform_1(%arg0: i32) -> (i32, i32) {
    %c0_i32 = arith.constant 0 : i32
    %c0_i32_0 = arith.constant 0 : i32
    %c0_i32_1 = arith.constant 0 : i32
    return %c0_i32, %c0_i32_0 : i32, i32
  }
  func.func @transform_2(%arg0: i32) -> (i32, i32) {
    %c0_i32 = arith.constant 0 : i32
    %c0_i32_0 = arith.constant 0 : i32
    %c0_i32_1 = arith.constant 0 : i32
    return %c0_i32, %c0_i32_0 : i32, i32
  }
  func.func @transform_3(%arg0: i32) -> (i32, i32) {
    %c0_i32 = arith.constant 0 : i32
    %c0_i32_0 = arith.constant 0 : i32
    %c0_i32_1 = arith.constant 0 : i32
    return %c0_i32, %c0_i32_0 : i32, i32
  }
}

</mosaic_0001>

<llo_original>
// kernel: tpu_custom_call.1
$region0: #{tpu_custom_call.1}
  #allocation0 [shape = 'u32[]', space=smem, size = 0x4, offset = 0x4, fixed_abs, tag = 'smem constant byte address 0x4 - core index']
  #allocation1 [shape = 'u32[144,128]{1,0:T(1,128)}', space=vmem, size = 0x12000, scoped, tag = 'internal scratch']
  %s0 = inlined_call_operand.hbm [shape: f32[4,128], index: 0, kind: input, shape index: {}]
  %s1 = inlined_call_operand.vmem [shape: f32[1,128], index: 1, kind: input, shape index: {}]
  %s2 = inlined_call_operand.vmem [shape: f32[1,128], index: 2, kind: input, shape index: {}]
  %s3 = inlined_call_operand.hbm [shape: f32[4,128], index: 3, kind: output, shape index: {}]
  %s4 = sld [smem:[#allocation0]]
  $region26: #{tpu_custom_call.1} parent=0
    _
  %s6 = ssub.s32 1, %s4
  %s7 = scalar_select 0, %s6, %s4
  $region1: #{tpu_custom_call.1} parent=0
    #allocation2 [shape = 'u8[2048]{0}', space=vmem, size = 0x800, scoped, tag = 'input window, operand 0, single buffered']
    #allocation3 [shape = 's32[1]{0}', space=sflag, size = 0x4, scoped, tag = 'scoped memory for tpu_custom_call.1']
    #allocation4 [shape = 's32[1]{0}', space=sflag, size = 0x4, scoped, tag = 'scoped memory for tpu_custom_call.1']
    #allocation5 [shape = 'u8[2048]{0}', space=vmem, size = 0x800, scoped, tag = 'output window, operand 0, single buffered']
    %8 = vsyncpa [#allocation3], 0
    %9 = vsyncpa [#allocation4], 0
    // Predicated region
    $region2: #{tpu_custom_call.1} parent=1 // pred_check
      _
    $region3: #{tpu_custom_call.1} parent=1 // pred_check_branch
      %11 = sbr.rel (0) target = $region5
    $region4: #{tpu_custom_call.1} parent=1 // pred_region
      %s13 = ssub.s32 64, 64
      %14 = vsyncadd [#allocation3], %s13
      %s16 = sshll.u32 [#allocation2], 4
      %s17 = int_to_ptr.vmem [resolvable:$true] %s16
      %19 = dma.hbm_to_vmem [thread:$0]  %s0, 64, %s17, [#allocation3]
    $region5: #{tpu_custom_call.1} parent=1 // pred_fallthru
      _
    // Predicated region
    $region6: #{tpu_custom_call.1} parent=1 // pred_check
      _
    $region7: #{tpu_custom_call.1} parent=1 // pred_check_branch
      %21 = sbr.rel (0) target = $region9
    $region8: #{tpu_custom_call.1} parent=1 // pred_region
      _
    $region9: #{tpu_custom_call.1} parent=1 // pred_fallthru
      _
    // Predicated region
    $region10: #{tpu_custom_call.1} parent=1 // pred_check
      _
    $region11: #{tpu_custom_call.1} parent=1 // pred_check_branch
      %23 = sbr.rel (0) target = $region13
    $region12: #{tpu_custom_call.1} parent=1 // pred_region
      _
    $region13: #{tpu_custom_call.1} parent=1 // pred_fallthru
      _
    // Predicated region
    $region14: #{tpu_custom_call.1} parent=1 // pred_check
      _
    $region15: #{tpu_custom_call.1} parent=1 // pred_check_branch
      %25 = sbr.rel (0) target = $region17
    $region16: #{tpu_custom_call.1} parent=1 // pred_region
      %26 = dma.done [#allocation3], 64
    $region17: #{tpu_custom_call.1} parent=1 // pred_fallthru
      _
    %v27 = vld [vmem:[#allocation2] sm:$0xf]
    %vm28 = vcmask 1043456
    %v29 = vsel %vm28, %v27, 0.0
    %v30 = vrot.slane %v29, 4
    %v31 = vadd.f32 %v29, %v30
    %v32 = vrot.slane %v31, 2
    %v33 = vadd.f32 %v31, %v32
    %v34 = vrot.slane %v33, 1
    %v35 = vadd.f32 %v33, %v34
    %v36 = vmul.f32 %v27, %v27
    %v37 = vsel %vm28, %v36, 0.0
    %v38 = vrot.slane %v37, 4
    %v39 = vadd.f32 %v37, %v38
    %v40 = vrot.slane %v39, 2
    %v41 = vadd.f32 %v39, %v40
    %v42 = vrot.slane %v41, 1
    %v43 = vadd.f32 %v41, %v42
    %44 = vrot.lane.b32.xlu0 %v35, 32
    %v45 = vpop.permute.xlu0 %44
    %v46 = vadd.f32 %v35, %v45
    %47 = vrot.lane.b32.xlu0 %v43, 32
    %v48 = vpop.permute.xlu0 %47
    %v49 = vadd.f32 %v43, %v48
    %50 = vrot.lane.b32.xlu0 %v35, 64
    %v51 = vpop.permute.xlu0 %50
    %v52 = vadd.f32 %v46, %v51
    %53 = vrot.lane.b32.xlu0 %v43, 64
    %v54 = vpop.permute.xlu0 %53
    %v55 = vadd.f32 %v49, %v54
    %56 = vrot.lane.b32.xlu0 %v35, 96
    %v57 = vpop.permute.xlu0 %56
    %v58 = vadd.f32 %v52, %v57
    %59 = vrot.lane.b32.xlu0 %v43, 96
    %v60 = vpop.permute.xlu0 %59
    %v61 = vadd.f32 %v55, %v60
    %v62 = vmul.f32 %v58, 0.0625
    %v63 = vmul.f32 %v61, 0.0625
    %v64 = vmul.f32 %v62, %v62
    %v65 = vsub.f32 %v63, %v64
    %v66 = vmax.f32 %v65, 0.0
    %v67 = vld [vmem:[%s1] sm:$0x1]
    %v68 = vadd.f32 %v66, 1e-05
    %v69 = vrsqrt.pop %v68
    %v70 = vmul.f32 %v67, %v69
    %v71 = vld [vmem:[%s2] sm:$0x1]
    %v72 = vmul.f32 %v62, %v70
    %v73 = vsub.f32 %v71, %v72
    %v75 = vlaneseq
    %v76 = vshrl.u32 %v75, 7
    %v77 = vsub.s32 0, %v76
    %v78 = vrot.slane %v70, %v77
    %v80 = vmul.f32 %v27, %v78
    %v82 = vlaneseq
    %v83 = vshrl.u32 %v82, 7
    %v84 = vsub.s32 0, %v83
    %v85 = vrot.slane %v73, %v84
    %v87 = vadd.f32 %v80, %v85
    %88 = vst [vmem:[#allocation5] sm:$0xf] %v87
    // Predicated region
    $region18: #{tpu_custom_call.1} parent=1 // pred_check
      _
    $region19: #{tpu_custom_call.1} parent=1 // pred_check_branch
      %90 = sbr.rel (0) target = $region21
    $region20: #{tpu_custom_call.1} parent=1 // pred_region
      %s92 = ssub.s32 64, 64
      %93 = vsyncadd [#allocation4], %s92
      %s95 = sshll.u32 [#allocation5], 4
      %s96 = int_to_ptr.vmem [resolvable:$true] %s95
      %98 = dma.vmem_to_hbm [thread:$0]  %s96, 64, %s3, [#allocation4]
    $region21: #{tpu_custom_call.1} parent=1 // pred_fallthru
      _
    // Predicated region
    $region22: #{tpu_custom_call.1} parent=1 // pred_check
      _
    $region23: #{tpu_custom_call.1} parent=1 // pred_check_branch
      %100 = sbr.rel (0) target = $region25
    $region24: #{tpu_custom_call.1} parent=1 // pred_region
      %101 = dma.done [#allocation4], 64
    $region25: #{tpu_custom_call.1} parent=1 // pred_fallthru
      _
    %102 = vsyncpa [#allocation3], 1
    %103 = vsyncpa [#allocation4], 1

</llo_original>
